<compile_context>
chip_gen: v7x
topology: tpu7x:2x2x1
jax: 0.10.0
libtpu: 0.0.40
codegen_flags: <defaults>
</compile_context>

<pallas_src>
import functools

import jax
import jax.numpy as jnp
from jax.experimental import pallas as pl
from jax.experimental.pallas import tpu as pltpu


def _round_up(x, m):
    return (x + m - 1) // m * m


def _margin_loss_kernel(ypred_ref, label_ref, out_ref, acc_ref, *,
                        margin, ignore_index, hw, tile_hw):
    j = pl.program_id(1)

    @pl.when(j == 0)
    def _():
        acc_ref[...] = jnp.zeros_like(acc_ref)

    yp = ypred_ref[0].astype(jnp.float32)        # (c, tile_hw)
    lab = label_ref[0]                           # (1, tile_hw) int32

    # Column validity: inside the real h*w extent AND not ignore_index.
    col = jax.lax.broadcasted_iota(jnp.int32, lab.shape, 1) + j * tile_hw
    in_bounds = col < hw
    ignore = lab == ignore_index
    lab = jnp.where(ignore, 0, lab)              # y_true[ignore] = 0
    valid = jnp.logical_and(in_bounds, jnp.logical_not(ignore))  # (1, tile_hw)

    # a_t = y_pred[true_class, pixel] via sublane one-hot select (c is tiny);
    # no float one-hot / extra multiply, and no MXU.
    cls = jax.lax.broadcasted_iota(jnp.int32, yp.shape, 0)        # (c, tile_hw)
    a_t = jnp.sum(jnp.where(cls == lab, yp, 0.0), axis=0, keepdims=True)

    m = jnp.clip(margin - (a_t - yp), 0.0, 100000.0)
    m = m * m
    # where() (not *) so garbage in the out-of-bounds tail cannot NaN-poison.
    acc_ref[...] += jnp.where(valid, m, 0.0)

    @pl.when(j == pl.num_programs(1) - 1)
    def _():
        out_ref[...] = jnp.sum(acc_ref[...]).reshape(1, 1, 1)


def margin_loss(y_pred, y_true, margin=0.9, reduction='sum',
                ignore_index=255, tile_hw=None):
    """MarginLoss forward.  y_pred: (b, c, h, w) float, y_true: (b, h, w) int."""
    b, c, h, w = y_pred.shape
    hw = h * w

    if ignore_index is None:
        ignore_index = -1    # class indices are >= 0, so nothing gets ignored

    # Free reshapes (no HBM data movement, NCHW is already contiguous).
    yp = y_pred.reshape(b, c, hw)
    yt = y_true.reshape(b, 1, hw).astype(jnp.int32)

    # Tile the lane (h*w) axis; target ~1 MiB y_pred blocks, lane-multiple.
    if tile_hw is None:
        elt = jnp.dtype(y_pred.dtype).itemsize
        tile_hw = max(128, ((1 << 20) // max(1, c * elt)) // 128 * 128)
    tile_hw = int(min(tile_hw, _round_up(hw, 128)))
    n_tiles = pl.cdiv(hw, tile_hw)

    kernel = functools.partial(_margin_loss_kernel,
                               margin=float(margin),
                               ignore_index=int(ignore_index),
                               hw=hw, tile_hw=tile_hw)

    partials = pl.pallas_call(
        kernel,
        out_shape=jax.ShapeDtypeStruct((b, 1, 1), jnp.float32),
        grid_spec=pltpu.PrefetchScalarGridSpec(
            num_scalar_prefetch=0,
            grid=(b, n_tiles),
            in_specs=[
                pl.BlockSpec((1, c, tile_hw), lambda i, j: (i, 0, j)),
                pl.BlockSpec((1, 1, tile_hw), lambda i, j: (i, 0, j)),
            ],
            out_specs=pl.BlockSpec((1, 1, 1), lambda i, j: (i, 0, 0)),
            scratch_shapes=[pltpu.VMEM((c, tile_hw), jnp.float32)],
        ),
        compiler_params=pltpu.CompilerParams(
            dimension_semantics=("parallel", "arbitrary")),
    )(yp, yt)

    total = jnp.sum(partials)
    if reduction == 'sum':
        return total
    elif reduction == 'mean':
        return total / jnp.float32(b * hw * c)
    # TODO(synk): reduction=None (per-pixel (b,h,w) sum over classes) would
    # need a lane-dense (b, h*w) output spec; not implemented here.
    raise NotImplementedError("reduction=None not implemented")


def _reference(y_pred, y_true, margin=0.9, reduction='sum', ignore_index=255):
    b, c, h, w = y_pred.shape
    yp = jnp.transpose(y_pred, (0, 2, 3, 1)).reshape(-1, c).astype(jnp.float32)
    yt = y_true.reshape(-1)
    ignore = yt == ignore_index
    yt = jnp.where(ignore, 0, yt)
    mask = 1.0 - ignore.astype(jnp.float32)
    a_t = jnp.take_along_axis(yp, yt[:, None].astype(jnp.int32), axis=1)
    m = jnp.clip(margin - (a_t - yp), 0.0, 100000.0) ** 2
    m = m * mask[:, None]
    if reduction == 'sum':
        return m.sum()
    return m.mean()


if __name__ == "__main__":
    key = jax.random.PRNGKey(0)
    k1, k2, k3 = jax.random.split(key, 3)

    # Primary check: module-sized inputs.
    b, c, h, w = 2, 4, 16, 16
    y_pred = jax.random.normal(k1, (b, c, h, w), dtype=jnp.float32)
    y_true = jax.random.randint(k2, (b, h, w), 0, c).astype(jnp.int32)
    ignore_sel = jax.random.bernoulli(k3, 0.1, (b, h, w))
    y_true = jnp.where(ignore_sel, 255, y_true)

    out = jax.block_until_ready(margin_loss(y_pred, y_true, 0.9, 'sum'))
    ref = _reference(y_pred, y_true, 0.9, 'sum')
    assert jnp.allclose(out, ref, rtol=1e-5, atol=1e-4), (out, ref)

    out_m = jax.block_until_ready(margin_loss(y_pred, y_true, 0.9, 'mean'))
    ref_m = _reference(y_pred, y_true, 0.9, 'mean')
    assert jnp.allclose(out_m, ref_m, rtol=1e-5, atol=1e-6), (out_m, ref_m)

    # Secondary check: ragged h*w (not a tile multiple) + multi-tile
    # accumulation across the 'arbitrary' grid axis.
    k4, k5 = jax.random.split(k3)
    b2, c2, h2, w2 = 1, 4, 20, 24          # hw = 480; tile_hw=256 -> 2 tiles
    yp2 = jax.random.normal(k4, (b2, c2, h2, w2), dtype=jnp.float32)
    yt2 = jax.random.randint(k5, (b2, h2, w2), 0, c2).astype(jnp.int32)
    out2 = jax.block_until_ready(margin_loss(yp2, yt2, 0.9, 'sum', tile_hw=256))
    ref2 = _reference(yp2, yt2, 0.9, 'sum')
    assert jnp.allclose(out2, ref2, rtol=1e-5, atol=1e-4), (out2, ref2)

    print("KERNEL_OK")
</pallas_src>

<mosaic_0001>
module attributes {stable_mosaic.version = 11 : i64} {
  func.func @_margin_loss_kernel(%arg0: i32, %arg1: i32, %arg2: memref<1x4x256xf32, #tpu.memory_space<vmem>>, %arg3: memref<1x1x256xi32, #tpu.memory_space<vmem>>, %arg4: memref<1x1x1xf32, #tpu.memory_space<vmem>>, %arg5: memref<4x256xf32, #tpu.memory_space<vmem>>) attributes {dimension_semantics = [#tpu.dimension_semantics<parallel>, #tpu.dimension_semantics<arbitrary>], iteration_bounds = array<i64: 2, 1>, scalar_prefetch = 0 : i64, scratch_operands = 1 : i64, tpu.core_type = #tpu.core_type<tc>, window_params = [{transform_indices = @transform_0, window_bounds = array<i64: 1, 4, 256>}, {transform_indices = @transform_1, window_bounds = array<i64: 1, 1, 256>}, {transform_indices = @transform_2, window_bounds = array<i64: 1, 1, 1>}]} {
    %c0_i32 = arith.constant 0 : i32
    %0 = arith.cmpi eq, %arg1, %c0_i32 : i32
    %1 = arith.extui %0 : i1 to i32
    %c0_i32_0 = arith.constant 0 : i32
    %2 = arith.cmpi ne, %1, %c0_i32_0 : i32
    scf.if %2 {
      %cst_20 = arith.constant 0.000000e+00 : f32
      %45 = vector.broadcast %cst_20 : f32 to vector<4x256xf32>
      %c0_21 = arith.constant 0 : index
      %c0_22 = arith.constant 0 : index
      %46 = vector.load %arg5[%c0_21, %c0_22] : memref<4x256xf32, #tpu.memory_space<vmem>>, vector<4x256xf32>
      tpu.vector_store %arg5[%c0_21, %c0_22], %45 {strides = array<i32>} : memref<4x256xf32, #tpu.memory_space<vmem>>, vector<4x256xf32>,
    } else {
    }
    %c0 = arith.constant 0 : index
    %c0_1 = arith.constant 0 : index
    %c0_2 = arith.constant 0 : index
    %3 = vector.load %arg2[%c0, %c0_1, %c0_2] : memref<1x4x256xf32, #tpu.memory_space<vmem>>, vector<1x4x256xf32>
    %4 = vector.shape_cast %3 : vector<1x4x256xf32> to vector<4x256xf32>
    %c0_3 = arith.constant 0 : index
    %c0_4 = arith.constant 0 : index
    %c0_5 = arith.constant 0 : index
    %5 = vector.load %arg3[%c0_3, %c0_4, %c0_5] : memref<1x1x256xi32, #tpu.memory_space<vmem>>, vector<1x1x256xi32>
    %6 = vector.shape_cast %5 : vector<1x1x256xi32> to vector<1x256xi32>
    %7 = tpu.iota {dimensions = array<i32: 1>} : vector<1x256xi32>
    %c256_i32 = arith.constant 256 : i32
    %8 = arith.muli %arg1, %c256_i32 : i32
    %9 = vector.broadcast %8 : i32 to vector<1x256xi32>
    %10 = arith.addi %7, %9 : vector<1x256xi32>
    %c256_i32_6 = arith.constant 256 : i32
    %11 = vector.broadcast %c256_i32_6 : i32 to vector<1x256xi32>
    %12 = arith.cmpi slt, %10, %11 : vector<1x256xi32>
    %c255_i32 = arith.constant 255 : i32
    %13 = vector.broadcast %c255_i32 : i32 to vector<1x256xi32>
    %14 = arith.cmpi eq, %6, %13 : vector<1x256xi32>
    %c0_i32_7 = arith.constant 0 : i32
    %15 = vector.broadcast %c0_i32_7 : i32 to vector<1x256xi32>
    %16 = arith.select %14, %15, %6 : vector<1x256xi1>, vector<1x256xi32>
    %cst = arith.constant dense<true> : vector<1x256xi1>
    %17 = arith.xori %14, %cst : vector<1x256xi1>
    %18 = arith.andi %12, %17 : vector<1x256xi1>
    %19 = tpu.iota {dimensions = array<i32: 0>} : vector<4x256xi32>
    %20 = vector.broadcast %16 : vector<1x256xi32> to vector<4x256xi32>
    %21 = arith.cmpi eq, %19, %20 : vector<4x256xi32>
    %cst_8 = arith.constant 0.000000e+00 : f32
    %22 = vector.broadcast %cst_8 : f32 to vector<4x256xf32>
    %23 = arith.select %21, %4, %22 : vector<4x256xi1>, vector<4x256xf32>
    %cst_9 = arith.constant dense<0.000000e+00> : vector<256xf32>
    %24 = vector.multi_reduction <add>, %23, %cst_9 [0] : vector<4x256xf32> to vector<256xf32>
    %25 = vector.shape_cast %24 : vector<256xf32> to vector<1x256xf32>
    %26 = vector.broadcast %25 : vector<1x256xf32> to vector<4x256xf32>
    %27 = arith.subf %26, %4 : vector<4x256xf32>
    %cst_10 = arith.constant 0.899999976 : f32
    %28 = vector.broadcast %cst_10 : f32 to vector<4x256xf32>
    %29 = arith.subf %28, %27 : vector<4x256xf32>
    %cst_11 = arith.constant 0.000000e+00 : f32
    %cst_12 = arith.constant 1.000000e+05 : f32
    %30 = vector.broadcast %cst_11 : f32 to vector<4x256xf32>
    %31 = arith.maximumf %30, %29 : vector<4x256xf32>
    %32 = vector.broadcast %cst_12 : f32 to vector<4x256xf32>
    %33 = arith.minimumf %32, %31 : vector<4x256xf32>
    %34 = arith.mulf %33, %33 : vector<4x256xf32>
    %c0_13 = arith.constant 0 : index
    %c0_14 = arith.constant 0 : index
    %35 = vector.load %arg5[%c0_13, %c0_14] : memref<4x256xf32, #tpu.memory_space<vmem>>, vector<4x256xf32>
    %cst_15 = arith.constant 0.000000e+00 : f32
    %36 = vector.shape_cast %18 : vector<1x256xi1> to vector<1x256xi1>
    %37 = vector.broadcast %36 : vector<1x256xi1> to vector<4x256xi1>
    %38 = vector.broadcast %cst_15 : f32 to vector<4x256xf32>
    %39 = arith.select %37, %34, %38 : vector<4x256xi1>, vector<4x256xf32>
    %40 = arith.addf %35, %39 : vector<4x256xf32>
    %c0_16 = arith.constant 0 : index
    %c0_17 = arith.constant 0 : index
    %41 = vector.load %arg5[%c0_16, %c0_17] : memref<4x256xf32, #tpu.memory_space<vmem>>, vector<4x256xf32>
    tpu.vector_store %arg5[%c0_16, %c0_17], %40 {strides = array<i32>} : memref<4x256xf32, #tpu.memory_space<vmem>>, vector<4x256xf32>,
    %c0_i32_18 = arith.constant 0 : i32
    %42 = arith.cmpi eq, %arg1, %c0_i32_18 : i32
    %43 = arith.extui %42 : i1 to i32
    %c0_i32_19 = arith.constant 0 : i32
    %44 = arith.cmpi ne, %43, %c0_i32_19 : i32
    scf.if %44 {
      %c0_20 = arith.constant 0 : index
      %c0_21 = arith.constant 0 : index
      %45 = vector.load %arg5[%c0_20, %c0_21] : memref<4x256xf32, #tpu.memory_space<vmem>>, vector<4x256xf32>
      %46 = vector.shape_cast %45 : vector<4x256xf32> to vector<1x4x256xf32>
      %cst_22 = arith.constant dense<0.000000e+00> : vector<1xf32>
      %47 = vector.multi_reduction <add>, %46, %cst_22 [1, 2] : vector<1x4x256xf32> to vector<1xf32>
      %48 = vector.shape_cast %47 : vector<1xf32> to vector<1x1x1xf32>
      %49 = vector.extract %48[0, 0, 0] : f32 from vector<1x1x1xf32>
      %50 = vector.broadcast %49 : f32 to vector<1x1x1xf32>
      %c0_23 = arith.constant 0 : index
      %c0_24 = arith.constant 0 : index
      %c0_25 = arith.constant 0 : index
      %51 = vector.load %arg4[%c0_23, %c0_24, %c0_25] : memref<1x1x1xf32, #tpu.memory_space<vmem>>, vector<1x1x1xf32>
      tpu.vector_store %arg4[%c0_23, %c0_24, %c0_25], %50 {strides = array<i32>} : memref<1x1x1xf32, #tpu.memory_space<vmem>>, vector<1x1x1xf32>,
    } else {
    }
    return
  }
  func.func @transform_0(%arg0: i32, %arg1: i32) -> (i32, i32, i32) {
    %c0_i32 = arith.constant 0 : i32
    %c0_i32_0 = arith.constant 0 : i32
    return %arg0, %c0_i32, %arg1 : i32, i32, i32
  }
  func.func @transform_1(%arg0: i32, %arg1: i32) -> (i32, i32, i32) {
    %c0_i32 = arith.constant 0 : i32
    %c0_i32_0 = arith.constant 0 : i32
    return %arg0, %c0_i32, %arg1 : i32, i32, i32
  }
  func.func @transform_2(%arg0: i32, %arg1: i32) -> (i32, i32, i32) {
    %c0_i32 = arith.constant 0 : i32
    %c0_i32_0 = arith.constant 0 : i32
    %c0_i32_1 = arith.constant 0 : i32
    return %arg0, %c0_i32, %c0_i32_0 : i32, i32, i32
  }
}

</mosaic_0001>

<llo_original>
// kernel: tpu_custom_call.1
$region0: #{tpu_custom_call.1}
  #allocation0 [shape = 'u32[]', space=smem, size = 0x4, offset = 0x4, fixed_abs, tag = 'smem constant byte address 0x4 - core index']
  #allocation1 [shape = 'u32[144,128]{1,0:T(1,128)}', space=vmem, size = 0x12000, scoped, tag = 'internal scratch']
  #allocation2 [shape = 'f32[4,256]{1,0:T(4,128)}', space=vmem, size = 0x1000, scoped, tag = 'scratch operand']
  %s0 = inlined_call_operand.hbm [shape: f32[2,4,256], index: 0, kind: input, shape index: {}]
  %s1 = inlined_call_operand.hbm [shape: s32[2,1,256], index: 1, kind: input, shape index: {}]
  %s2 = inlined_call_operand.vmem [shape: f32[2,1,1], index: 2, kind: output, shape index: {}]
  %s3 = sld [smem:[#allocation0]]
  $region57: #{tpu_custom_call.1} parent=0
    _
  %s5 = ssub.s32 1, %s3
  %s6 = scalar_select 0, %s5, %s3
  $region1: #{tpu_custom_call.1} parent=0
    #allocation3 [shape = 'u8[8192]{0}', space=vmem, size = 0x2000, scoped, tag = 'input window, operand 0']
    #allocation4 [shape = 's32[2]{0}', space=sflag, size = 0x8, scoped, tag = 'scoped memory for tpu_custom_call.1']
    #allocation5 [shape = 'u8[2048]{0}', space=vmem, size = 0x800, scoped, tag = 'input window, operand 1']
    #allocation6 [shape = 's32[2]{0}', space=sflag, size = 0x8, scoped, tag = 'scoped memory for tpu_custom_call.1']
    %7 = vsyncpa [#allocation4], 0
    %s8 = scalar_lea.sflag [#allocation4], 1
    %9 = vsyncpa %s8, 0
    %10 = vsyncpa [#allocation6], 0
    %s11 = scalar_lea.sflag [#allocation6], 1
    %12 = vsyncpa %s11, 0
    loop: start=0, step=1, limit=4
    $region2: #{tpu_custom_call.1} parent=1 // loop_pre_header
      _
    $region3: #{tpu_custom_call.1} parent=1 // loop_header
      %s14 = sphi 0, %s18
      %p15 = scmp.ge.s32.totalorder %s14, 4
      %s21 = sphi 0, %s33
      %s22 = sphi 0, %s29
      %s23 = sphi 0, %s21
      %s24 = sphi 0, %s22
      %s25 = sphi 0, %s23
      %s26 = sphi 0, %s24
      %s38 = sphi 0, %s40
      %s41 = sphi 0, %s38
      %s42 = sphi 0, %s41
      %s58 = sphi 0, %s42
      %s66 = sphi 0, %s68
      %s69 = sphi 0, %s66
      %s70 = sphi 0, %s69
      %s86 = sphi 0, %s70
      %s92 = sphi 0, %s94
      %s95 = sphi 0, %s92
      %s96 = sphi 0, %s95
      %s112 = sphi 0, %s96
    $region4: #{tpu_custom_call.1} parent=1 // loop_header_branch
      %17 = sbr.rel (%p15) target = $region8
    $region5: #{tpu_custom_call.1} parent=1 // loop_body
      %s19 = ssub.s32 %s14, 1
      %s20 = ssub.s32 %s14, 2
      %s27 = sadd.s32 1, %s22
      %p28 = scmp.ge.s32.totalorder %s27, 1
      %s29 = scalar_select %p28, 0, %s27
      %s30 = sadd.s32 1, %s21
      %s31 = scalar_select %p28, %s30, %s21
      %p32 = scmp.ge.s32.totalorder %s31, 2
      %s33 = scalar_select %p32, 0, %s31
      %s34 = ssub.s32 %s21, %s33
      %s35 = ssub.s32 %s22, %s29
      %s36 = sor.u32 %s34, %s35
      %p37 = scmp.eq.s32.totalorder %s36, 0
      %s39 = sadd.s32 %s38, 1
      %s40 = scalar_select %p37, %s38, %s39
      %p43 = pneg %p37
      %p44 = scmp.eq.s32.totalorder %s14, 1
      %p45 = por %p43, %p44
      %p46 = scmp.ne.s32.totalorder %s38, %s41
      %p47 = scmp.eq.s32.totalorder %s14, 0
      %p48 = por %p46, %p47
      %p49 = scmp.ne.s32.totalorder %s38, %s41
      %p50 = scmp.eq.s32.totalorder %s19, 1
      %p51 = por %p49, %p50
      %p52 = scmp.ne.s32.totalorder %s41, %s42
      %p53 = scmp.eq.s32.totalorder %s19, 0
      %p54 = por %p52, %p53
      %p55 = scmp.ne.s32.totalorder %s41, %s42
      %p56 = scmp.eq.s32.totalorder %s20, 1
      %p57 = por %p55, %p56
      %p59 = scmp.ne.s32.totalorder %s42, %s58
      %p60 = scmp.eq.s32.totalorder %s20, 0
      %p61 = por %p59, %p60
      %s62 = ssub.s32 %s21, %s33
      %s63 = ssub.s32 %s22, %s29
      %s64 = sor.u32 %s62, %s63
      %p65 = scmp.eq.s32.totalorder %s64, 0
      %s67 = sadd.s32 %s66, 1
      %s68 = scalar_select %p65, %s66, %s67
      %p71 = pneg %p65
      %p72 = scmp.eq.s32.totalorder %s14, 1
      %p73 = por %p71, %p72
      %p74 = scmp.ne.s32.totalorder %s66, %s69
      %p75 = scmp.eq.s32.totalorder %s14, 0
      %p76 = por %p74, %p75
      %p77 = scmp.ne.s32.totalorder %s66, %s69
      %p78 = scmp.eq.s32.totalorder %s19, 1
      %p79 = por %p77, %p78
      %p80 = scmp.ne.s32.totalorder %s69, %s70
      %p81 = scmp.eq.s32.totalorder %s19, 0
      %p82 = por %p80, %p81
      %p83 = scmp.ne.s32.totalorder %s69, %s70
      %p84 = scmp.eq.s32.totalorder %s20, 1
      %p85 = por %p83, %p84
      %p87 = scmp.ne.s32.totalorder %s70, %s86
      %p88 = scmp.eq.s32.totalorder %s20, 0
      %p89 = por %p87, %p88
      %s90 = ssub.s32 %s21, %s33
      %p91 = scmp.eq.s32.totalorder %s90, 0
      %s93 = sadd.s32 %s92, 1
      %s94 = scalar_select %p91, %s92, %s93
      %p97 = pneg %p91
      %p98 = scmp.eq.s32.totalorder %s14, 1
      %p99 = por %p97, %p98
      %p100 = scmp.ne.s32.totalorder %s92, %s95
      %p101 = scmp.eq.s32.totalorder %s14, 0
      %p102 = por %p100, %p101
      %p103 = scmp.ne.s32.totalorder %s92, %s95
      %p104 = scmp.eq.s32.totalorder %s19, 1
      %p105 = por %p103, %p104
      %p106 = scmp.ne.s32.totalorder %s95, %s96
      %p107 = scmp.eq.s32.totalorder %s19, 0
      %p108 = por %p106, %p107
      %p109 = scmp.ne.s32.totalorder %s95, %s96
      %p110 = scmp.eq.s32.totalorder %s20, 1
      %p111 = por %p109, %p110
      %p113 = scmp.ne.s32.totalorder %s96, %s112
      %p114 = scmp.eq.s32.totalorder %s20, 0
      %p115 = por %p113, %p114
      %p116 = scmp.le.s32.totalorder 1, %s14
      %p117 = scmp.lt.s32.totalorder %s14, 3
      %p118 = pnand %p116, %p117
      %p119 = pneg %p118
      // Predicated region
      $region9: #{tpu_custom_call.1} parent=5 // pred_check
        _
      $region10: #{tpu_custom_call.1} parent=5 // pred_check_branch
        %121 = sbr.rel (%p118) target = $region12
      $region11: #{tpu_custom_call.1} parent=5 // pred_region
        %s122 = ssub.s32 %s14, 1
      $region12: #{tpu_custom_call.1} parent=5 // pred_fallthru
        _
      %p123 = scmp.lt.s32.totalorder %s14, 2
      // Predicated region
      $region13: #{tpu_custom_call.1} parent=5 // pred_check
        %p124 = pneg %p123
      $region14: #{tpu_custom_call.1} parent=5 // pred_check_branch
        %126 = sbr.rel (%p124) target = $region16
      $region15: #{tpu_custom_call.1} parent=5 // pred_region
        // Predicated region
        $region17: #{tpu_custom_call.1} parent=15 // pred_check
          %p127 = pneg %p48
        $region18: #{tpu_custom_call.1} parent=15 // pred_check_branch
          %129 = sbr.rel (%p127) target = $region20
        $region19: #{tpu_custom_call.1} parent=15 // pred_region
          %s130 = sand.u32 %s38, 1
          %s131 = scalar_lea.sflag [#allocation4], %s130
          %s132 = sand.u32 %s38, 1
          %s133 = smul.addr %s132, 8
          %s134 = scalar_lea.vmem [#allocation3], %s133
          %s135 = smul.u32 2, %s22
          %s137 = ssub.s32 128, 128
          %138 = vsyncadd %s131, %s137
          %s139 = smul.addr %s21, 2
          %s140 = sadd.s32 %s135, %s139
          %s141 = smul.addr %s140, 64
          %s142 = scalar_lea.hbm %s0, %s141
          %s144 = sshll.u32 %s134, 4
          %s145 = int_to_ptr.vmem [resolvable:$true] %s144
          %147 = dma.hbm_to_vmem [thread:$0]  %s142, 128, %s145, %s131
        $region20: #{tpu_custom_call.1} parent=15 // pred_fallthru
          _
        // Predicated region
        $region21: #{tpu_custom_call.1} parent=15 // pred_check
          %p148 = pneg %p76
        $region22: #{tpu_custom_call.1} parent=15 // pred_check_branch
          %150 = sbr.rel (%p148) target = $region24
        $region23: #{tpu_custom_call.1} parent=15 // pred_region
          %s151 = sand.u32 %s66, 1
          %s152 = scalar_lea.sflag [#allocation6], %s151
          %s153 = sand.u32 %s66, 1
          %s154 = smul.addr %s153, 2
          %s155 = scalar_lea.vmem [#allocation5], %s154
          %s156 = smul.u32 2, %s22
          %s158 = ssub.s32 32, 32
          %159 = vsyncadd %s152, %s158
          %s160 = smul.addr %s21, 2
          %s161 = sadd.s32 %s156, %s160
          %s162 = smul.addr %s161, 16
          %s163 = scalar_lea.hbm %s1, %s162
          %s165 = sshll.u32 %s155, 4
          %s166 = int_to_ptr.vmem [resolvable:$true] %s165
          %168 = dma.hbm_to_vmem [thread:$0]  %s163, 32, %s166, %s152
        $region24: #{tpu_custom_call.1} parent=15 // pred_fallthru
          _
      $region16: #{tpu_custom_call.1} parent=5 // pred_fallthru
        _
      %p169 = scmp.le.s32.totalorder 1, %s14
      %p170 = scmp.lt.s32.totalorder %s14, 3
      %p171 = pnand %p169, %p170
      %p172 = pneg %p171
      // Predicated region
      $region25: #{tpu_custom_call.1} parent=5 // pred_check
        _
      $region26: #{tpu_custom_call.1} parent=5 // pred_check_branch
        %174 = sbr.rel (%p171) target = $region28
      $region27: #{tpu_custom_call.1} parent=5 // pred_region
        %s175 = ssub.s32 %s14, 1
        %s176 = sand.u32 %s41, 1
        %s177 = scalar_lea.sflag [#allocation4], %s176
        %s178 = sand.u32 %s41, 1
        %s179 = smul.addr %s178, 8
        %s180 = scalar_lea.vmem [#allocation3], %s179
        // Predicated region
        $region29: #{tpu_custom_call.1} parent=27 // pred_check
          %p181 = pneg %p54
        $region30: #{tpu_custom_call.1} parent=27 // pred_check_branch
          %183 = sbr.rel (%p181) target = $region32
        $region31: #{tpu_custom_call.1} parent=27 // pred_region
          %184 = dma.done %s177, 128
        $region32: #{tpu_custom_call.1} parent=27 // pred_fallthru
          _
        %s185 = sand.u32 %s69, 1
        %s186 = scalar_lea.sflag [#allocation6], %s185
        %s187 = sand.u32 %s69, 1
        %s188 = smul.addr %s187, 2
        %s189 = scalar_lea.vmem [#allocation5], %s188
        // Predicated region
        $region33: #{tpu_custom_call.1} parent=27 // pred_check
          %p190 = pneg %p82
        $region34: #{tpu_custom_call.1} parent=27 // pred_check_branch
          %192 = sbr.rel (%p190) target = $region36
        $region35: #{tpu_custom_call.1} parent=27 // pred_region
          %193 = dma.done %s186, 32
        $region36: #{tpu_custom_call.1} parent=27 // pred_fallthru
          _
        %s194 = sand.u32 %s41, 1
        %s195 = scalar_lea.sflag [#allocation4], %s194
        %s196 = sand.u32 %s41, 1
        %s197 = smul.addr %s196, 8
        %s198 = scalar_lea.vmem [#allocation3], %s197
        %p199 = pneg %p54
        %p200 = pneg %p51
        %s201 = sand.u32 %s69, 1
        %s202 = scalar_lea.sflag [#allocation6], %s201
        %s203 = sand.u32 %s69, 1
        %s204 = smul.addr %s203, 2
        %s205 = scalar_lea.vmem [#allocation5], %s204
        %p206 = pneg %p82
        %p207 = pneg %p79
        %p208 = pneg %p108
        %p209 = pneg %p105
        %p210 = scmp.lt.s32.totalorder %s23, 1
        %s211 = scalar_select %p210, %s23, 1
        %s212 = scalar_lea.vmem %s2, %s211
        %s213 = smul.u32 2, %s24
        %s214 = smul.u32 2, %s24
        %p215 = scmp.lt.s32.totalorder %s23, 1
        %s216 = scalar_select %p215, %s23, 1
        %s217 = scalar_lea.vmem %s2, %s216
        %p218 = scmp.eq.s32.totalorder %s24, 0
        // Predicated region
        $region37: #{tpu_custom_call.1} parent=27 // pred_check
          %p219 = pneg %p218
        $region38: #{tpu_custom_call.1} parent=27 // pred_check_branch
          %221 = sbr.rel (%p219) target = $region40
        $region39: #{tpu_custom_call.1} parent=27 // pred_region
          %222 = vst [vmem:[#allocation2] sm:$0xff] 0.0
        $region40: #{tpu_custom_call.1} parent=27 // pred_fallthru
          _
        %v223 = vld [vmem:[%s180] sm:$0xff]
        %v224 = vld [vmem:[%s189] sm:$0x3]
        %v225 = vlaneseq
        %v226 = vand.u32 %v225, 127
        %v227 = vadd.s32 %v226, 128
        %s228 = smul.u32 %s24, 256
        %v229 = vstv %s228
        %v230 = vadd.s32 %v226, %v229
        %v231 = vadd.s32 %v227, %v229
        %vm232 = vcmp.lt.s32.totalorder %v230, 256
        %vm233 = vcmp.lt.s32.totalorder %v231, 256
        %vm234 = vcmp.eq.s32.totalorder %v224, 255
        %v235 = vsel %vm234, 0, %v224
        %vm236 = vmxor %vm234, 1
        %v237 = vsel %vm236, 1, 0
        %v238 = vlaneseq
        %v239 = vshrl.u32 %v238, 7
        %v240 = vsub.s32 0, %v239
        %v241 = vrot.slane %v237, %v240
        %v242 = vlaneseq
        %v243 = vshrl.u32 %v242, 7
        %v244 = vsub.s32 1, %v243
        %v245 = vrot.slane %v237, %v244
        %vm246 = vcmp.ne.s32.totalorder %v241, 0
        %vm247 = vcmp.ne.s32.totalorder %v245, 0
        %vm248 = vmand %vm232, %vm246
        %vm249 = vmand %vm233, %vm247
        %v250 = vlaneseq
        %v251 = vshrl.u32 %v250, 7
        %v252 = vlaneseq
        %v253 = vshrl.u32 %v252, 7
        %v254 = vsub.s32 0, %v253
        %v255 = vrot.slane %v235, %v254
        %v256 = vlaneseq
        %v257 = vshrl.u32 %v256, 7
        %v258 = vsub.s32 1, %v257
        %v259 = vrot.slane %v235, %v258
        %vm260 = vcmp.eq.s32.totalorder %v251, %v255
        %vm261 = vcmp.eq.s32.totalorder %v251, %v259
        %v263 = vcombine.high %v223, %v223
        %v265 = vsel %vm260, %v223, 0.0
        %v266 = vsel %vm261, %v263, 0.0
        %vm267 = vcmask 1043456
        %v268 = vsel %vm267, %v265, 0.0
        %v269 = vrot.slane %v268, 4
        %v270 = vadd.f32 %v268, %v269
        %v271 = vrot.slane %v270, 2
        %v272 = vadd.f32 %v270, %v271
        %v273 = vrot.slane %v272, 1
        %v274 = vadd.f32 %v272, %v273
        %v275 = vsel %vm267, %v266, 0.0
        %v276 = vrot.slane %v275, 4
        %v277 = vadd.f32 %v275, %v276
        %v278 = vrot.slane %v277, 2
        %v279 = vadd.f32 %v277, %v278
        %v280 = vrot.slane %v279, 1
        %v281 = vadd.f32 %v279, %v280
        %v282 = vsub.f32 %v274, %v223
        %v283 = vsub.f32 %v281, %v263
        %v284 = vsub.f32 0.9, %v282
        %v285 = vsub.f32 0.9, %v283
        %v286 = vmax.f32 %v284, 0.0
        %v287 = vmax.f32 %v285, 0.0
        %v288 = vmin.f32 %v286, 100000.0
        %v289 = vmin.f32 %v287, 100000.0
        %v290 = vmul.f32 %v288, %v288
        %v291 = vmul.f32 %v289, %v289
        %v292 = vld [vmem:[#allocation2] sm:$0xff]
        %v293 = vsel %vm248, 1, 0
        %v294 = vsel %vm249, 1, 0
        %v295 = vlaneseq
        %v296 = vshrl.u32 %v295, 7
        %v297 = vsub.s32 0, %v296
        %v298 = vrot.slane %v293, %v297
        %v299 = vlaneseq
        %v300 = vshrl.u32 %v299, 7
        %v301 = vsub.s32 0, %v300
        %v302 = vrot.slane %v294, %v301
        %vm303 = vcmp.eq.s32.totalorder %v298, 1
        %vm304 = vcmp.eq.s32.totalorder %v302, 1
        %v305 = vsel %vm303, %v290, 0.0
        %v306 = vsel %vm304, %v291, 0.0
        %v309 = vcombine.low %v305, %v306
        %v311 = vadd.f32 %v292, %v309
        %312 = vst [vmem:[#allocation2] sm:$0xff] %v311
        // Predicated region
        $region41: #{tpu_custom_call.1} parent=27 // pred_check
          %p313 = pneg %p218
        $region42: #{tpu_custom_call.1} parent=27 // pred_check_branch
          %315 = sbr.rel (%p313) target = $region44
        $region43: #{tpu_custom_call.1} parent=27 // pred_region
          %v316 = vld [vmem:[#allocation2] sm:$0xff]
          %v318 = vcombine.high %v316, %v316
          %v320 = vsel %vm267, %v316, 0.0
          %v321 = vsel %vm267, %v318, 0.0
          %v322 = vadd.f32 %v320, %v321
          %323 = vadd.xlane.f32.xlu0 %v322
          %v324 = vpop.xlane.xlu0 %323
          %v325 = vrot.slane %v324, 4
          %v326 = vadd.f32 %v324, %v325
          %v327 = vrot.slane %v326, 2
          %v328 = vadd.f32 %v326, %v327
          %v329 = vrot.slane %v328, 1
          %v330 = vadd.f32 %v328, %v329
          %s331 = vtos %v330
          %v332 = vstv %s331
          %vm333 = vcmask 0
          %334 = vst.msk [vmem:[%s217] sm:$0x1] %vm333, %v332
        $region44: #{tpu_custom_call.1} parent=27 // pred_fallthru
          _
        %p335 = scmp.lt.s32.totalorder %s23, 1
        %s336 = scalar_select %p335, %s23, 1
        %s337 = scalar_lea.vmem %s2, %s336
        // Predicated region
        $region45: #{tpu_custom_call.1} parent=27 // pred_check
          %p338 = pneg %p105
        $region46: #{tpu_custom_call.1} parent=27 // pred_check_branch
          %340 = sbr.rel (%p338) target = $region48
        $region47: #{tpu_custom_call.1} parent=27 // pred_region
          _
        $region48: #{tpu_custom_call.1} parent=27 // pred_fallthru
          _
      $region28: #{tpu_custom_call.1} parent=5 // pred_fallthru
        _
      %p341 = scmp.le.s32.totalorder 2, %s14
      // Predicated region
      $region49: #{tpu_custom_call.1} parent=5 // pred_check
        %p342 = pneg %p341
      $region50: #{tpu_custom_call.1} parent=5 // pred_check_branch
        %344 = sbr.rel (%p342) target = $region52
      $region51: #{tpu_custom_call.1} parent=5 // pred_region
        %s345 = ssub.s32 %s14, 2
        // Predicated region
        $region53: #{tpu_custom_call.1} parent=51 // pred_check
          %p346 = pneg %p111
        $region54: #{tpu_custom_call.1} parent=51 // pred_check_branch
          %348 = sbr.rel (%p346) target = $region56
        $region55: #{tpu_custom_call.1} parent=51 // pred_region
          %p349 = scmp.lt.s32.totalorder %s25, 1
          %s350 = scalar_select %p349, %s25, 1
          %s351 = scalar_lea.vmem %s2, %s350
        $region56: #{tpu_custom_call.1} parent=51 // pred_fallthru
          _
      $region52: #{tpu_custom_call.1} parent=5 // pred_fallthru
        _
    $region6: #{tpu_custom_call.1} parent=1 // loop_footer
      %s18 = sadd.s32 1, %s14
    $region7: #{tpu_custom_call.1} parent=1 // loop_footer_branch
      %13 = sbr.rel target = $region3
    $region8: #{tpu_custom_call.1} parent=1 // loop_exit
      _
    %352 = vsyncpa [#allocation4], 1
    %s353 = scalar_lea.sflag [#allocation4], 1
    %354 = vsyncpa %s353, 1
    %355 = vsyncpa [#allocation6], 1
    %s356 = scalar_lea.sflag [#allocation6], 1
    %357 = vsyncpa %s356, 1

</llo_original>
